<compile_context>
chip_gen: v7x
topology: tpu7x:2x2x1
jax: 0.10.0
libtpu: 0.0.40
codegen_flags: <defaults>
</compile_context>

<pallas_src>
import functools
import math

import jax
import jax.numpy as jnp
from jax import lax
from jax.experimental import pallas as pl
from jax.experimental.pallas import tpu as pltpu


# ---------------- trace-time helpers -----------------------------------------

def _log_t_py(u, t):
    if t == 1.0:
        return math.log(u)
    return (u ** (1.0 - t) - 1.0) / (1.0 - t)


def _int_pow(x, m):
    """x**m for a Python int m >= 1 via binary exponentiation (VPU mults)."""
    result = None
    acc = x
    while m > 0:
        if m & 1:
            result = acc if result is None else result * acc
        m >>= 1
        if m:
            acc = acc * acc
    return result


def _half_int(p):
    """Return 2*p as an int if p is a (half-)integer with 0 < |2p| <= 16."""
    two_p = 2.0 * float(p)
    n = round(two_p)
    if abs(two_p - n) < 1e-9 and 0 < abs(n) <= 16:
        return int(n)
    return None


def _pow_const(x, p):
    """x**p with trace-time float p; x >= 0.

    Half-integer exponents lower to one sqrt/rsqrt + VPU multiplies; the
    generic fallback is an explicit exp(p*log(x)) (log(0) = -inf behaves like
    pow for both exponent signs).

    NOTE: the rsqrt fast path returns inf at x == 0 for negative half-integer
    exponents; unreachable for supported temperatures (t2 > 1 keeps base >= 1,
    t2 < 1 only uses positive exponents).
    """
    p = float(p)
    if p == 0.0:
        return jnp.ones_like(x)
    if p == 1.0:
        return x
    n = _half_int(p)
    if n is not None:
        if n < 0:
            if n % 2 == 0:
                return 1.0 / _int_pow(x, (-n) // 2)
            return _int_pow(lax.rsqrt(x), -n)
        if n % 2 == 0:
            return _int_pow(x, n // 2)
        return _int_pow(jnp.sqrt(x), n)
    return jnp.exp(p * jnp.log(x))


def _shared_pows(base, a, b):
    """(base**a, base**b) sharing a single EUP primitive over the (C,TN) block.

    Half-integer fast path: one sqrt/rsqrt (or one reciprocal when both
    exponents are negative integers) feeds both integer power chains.
    Generic path: one log + two exps (vs two logs + two exps for independent
    generic pows).  base == 0 -> log = -inf -> exp gives 0 / inf like pow.
    """
    na, nb = _half_int(a), _half_int(b)
    if na is not None and nb is not None and (na < 0) == (nb < 0):
        neg = na < 0
        ma, mb = abs(na), abs(nb)
        if ma % 2 == 0 and mb % 2 == 0:
            r, ma, mb = base, ma // 2, mb // 2
            if neg:
                r = 1.0 / r
        elif neg:
            r = lax.rsqrt(base)          # base >= 1 whenever exponents < 0
        else:
            r = jnp.sqrt(base)
        return _int_pow(r, ma), _int_pow(r, mb)
    log_base = jnp.log(base)
    return jnp.exp(a * log_base), jnp.exp(b * log_base)


# ---------------------------- Pallas kernel ----------------------------------

def _bi_tempered_kernel(pred_ref, label_ref, loss_ref, *, t1, t2, on_val,
                        avg_val, num_iters, const_term):
    # Transposed, lane-dense layout: classes on sublanes (axis 0), examples on
    # lanes (axis 1).
    pred = pred_ref[...].astype(jnp.float32)            # (C, TN)
    lbl = label_ref[...]                                 # (1, TN) int32
    c, tn = pred.shape
    classes = lax.broadcasted_iota(jnp.int32, (c, tn), 0)
    sel = classes == lbl

    def row_sum(x):
        return jnp.sum(x, axis=0, keepdims=True)

    def row_sum_at_label(x):
        return jnp.sum(jnp.where(sel, x, 0.0), axis=0, keepdims=True)

    # --- tempered softmax over the class (sublane) axis ---
    if t2 == 1.0:
        m = jnp.max(pred, axis=0, keepdims=True)
        d = pred - m
        e = jnp.exp(d)
        sum_e = row_sum(e)
        log_z = jnp.log(sum_e)                           # (1, TN) row
        prob = e * (1.0 / sum_e)                         # exact recip, row only
        base = None
    else:
        inv_1m_t2 = 1.0 / (1.0 - t2)
        mu = jnp.max(pred, axis=0, keepdims=True)        # (1, TN)
        if t2 > 1.0:
            # fixed-point normalization (tail heaviness); base >= 1 here.
            init_norm = pred - mu
            norm_pred = init_norm
            for _ in range(num_iters):
                z = jnp.maximum(1.0 + (1.0 - t2) * norm_pred, 0.0)
                part = row_sum(_pow_const(z, inv_1m_t2))
                norm_pred = init_norm * _pow_const(part, 1.0 - t2)
            z = jnp.maximum(1.0 + (1.0 - t2) * norm_pred, 0.0)
            part = row_sum(_pow_const(z, inv_1m_t2))
            # norm_const = -log_t(1/part, t2) + mu
            norm_const = -(_pow_const(part, t2 - 1.0) - 1.0) / (1.0 - t2) + mu
        else:
            # binary-search normalization (finite support, t2 < 1)
            norm_pred = pred - mu
            eff_dim = row_sum(
                (norm_pred > -1.0 / (1.0 - t2)).astype(jnp.float32))
            lower = jnp.zeros((1, tn), jnp.float32)
            upper = -(_pow_const(eff_dim, t2 - 1.0) - 1.0) / (1.0 - t2)
            for _ in range(num_iters):
                lp = (upper + lower) * 0.5
                z = jnp.maximum(1.0 + (1.0 - t2) * (norm_pred - lp), 0.0)
                sum_probs = row_sum(_pow_const(z, inv_1m_t2))
                update = (sum_probs < 1.0).astype(jnp.float32)
                lower = lower * update + (1.0 - update) * lp
                upper = upper * (1.0 - update) + update * lp
            norm_const = (upper + lower) * 0.5 + mu
        base = jnp.maximum(1.0 + (1.0 - t2) * (pred - norm_const), 0.0)

    # --- bi-tempered loss terms, row-reduced (no (C,TN) logt_prob temp) ---
    if t1 == 1.0:
        if base is None:
            s = d - log_z                                # log(prob), VPU only
            logt_at_label = row_sum_at_label(s)
            sum_logt = row_sum(s) if avg_val != 0.0 else None
        else:
            prob = _pow_const(base, inv_1m_t2)
            logt_at_label = jnp.log(row_sum_at_label(prob))
            sum_logt = row_sum(jnp.log(prob)) if avg_val != 0.0 else None
        sum_pow = row_sum(prob)                          # (2 - t1) == 1
    else:
        inv_1m_t1 = 1.0 / (1.0 - t1)
        if base is None:
            # p1 = prob^(1-t1) = exp((1-t1)*(d - logZ)): one exp per element.
            p1 = jnp.exp((1.0 - t1) * (d - log_z))
        else:
            # prob and p1 share one EUP primitive (rsqrt/sqrt or log).
            prob, p1 = _shared_pows(base, inv_1m_t2, (1.0 - t1) * inv_1m_t2)
        # logt_prob = (p1 - 1)/(1 - t1); reduce p1 directly.
        logt_at_label = (row_sum_at_label(p1) - 1.0) * inv_1m_t1
        sum_logt = ((row_sum(p1) - float(c)) * inv_1m_t1
                    if avg_val != 0.0 else None)
        sum_pow = row_sum(p1 * prob) * (1.0 / (2.0 - t1))   # prob^(2-t1)

    cross = (on_val - avg_val) * logt_at_label
    if avg_val != 0.0:
        cross = cross + avg_val * sum_logt
    # one-hot-only terms are folded into the trace-time constant `const_term`.
    loss_ref[...] = const_term - cross + sum_pow         # (1, TN)


# ------------------------------ wrapper ---------------------------------------

def _per_col_bytes(c):
    # double-buffered pred block (f32) + label/out rows + ~14 live (c, TN)
    # f32 temporaries inside the kernel.
    return 4 * (2 * c + 4 + 14 * c)


def _pick_tile_n(n, c, budget_bytes=12 * 1024 * 1024, cap=16384):
    """Lane-tile size: multiple of 128, VMEM-budgeted (v7x-safe), capped."""
    per_col = _per_col_bytes(c)
    max_tile = max(128, (budget_bytes // per_col) // 128 * 128)
    tile_n = int(min(max_tile, cap))
    needed = ((n + 127) // 128) * 128
    tile_n = min(tile_n, needed)
    # Prefer >= 2 grid steps when there is enough work (megacore / v7x 2 TCs).
    if needed >= 256 and needed < 2 * tile_n:
        tile_n = max(128, ((needed + 255) // 256) * 128)
    return tile_n


def bi_tempered_loss_pallas(pred, label, *, t1, t2, num_classes,
                            label_smooth_val=0.0, num_iters=5,
                            reduction='mean', loss_weight=1.0,
                            weight=None, avg_factor=None, tile_n=None,
                            pred_transposed=False):
    """pred: (N, C) float logits (or (C, N) with pred_transposed=True);
    label: (N,) int class indices."""
    if pred_transposed:
        c, n = pred.shape
    else:
        n, c = pred.shape
    assert c == num_classes
    t1 = float(t1)
    t2 = float(t2)
    avg_val = float(label_smooth_val) / num_classes
    on_val = 1.0 - float(label_smooth_val) + avg_val

    # Trace-time constant: one-hot-only terms summed over the class axis.
    const_term = (on_val * _log_t_py(on_val + 1e-10, t1)
                  + (c - 1) * avg_val * _log_t_py(avg_val + 1e-10, t1)
                  - (on_val ** (2.0 - t1)
                     + (c - 1) * avg_val ** (2.0 - t1)) / (2.0 - t1))

    if tile_n is None:
        tile_n = _pick_tile_n(n, c)
    n_pad = -(-n // tile_n) * tile_n

    # Lane-dense transposed layout (classes on sublanes, examples on lanes).
    # Pad/transpose in the native dtype (the kernel casts on load).  Producers
    # that already emit (C, N) logits should pass pred_transposed=True to skip
    # this relayout pass entirely.
    if pred_transposed:
        pred_t = jnp.pad(pred, ((0, 0), (0, n_pad - n)))
    else:
        pred_t = jnp.pad(pred, ((0, n_pad - n), (0, 0))).T
    label_row = jnp.pad(label.astype(jnp.int32),
                        (0, n_pad - n)).reshape(1, n_pad)

    kernel = functools.partial(
        _bi_tempered_kernel, t1=t1, t2=t2, on_val=on_val, avg_val=avg_val,
        num_iters=int(num_iters), const_term=float(const_term))

    # Raise the scoped VMEM limit only when the estimate needs it (keeps the
    # same code path safe on v7x's smaller per-TC VMEM).
    est_vmem = _per_col_bytes(c) * tile_n
    vmem_limit = None
    if est_vmem > 12 * 1024 * 1024:
        vmem_limit = int(min(2 * est_vmem, 48 * 1024 * 1024))

    loss_row = pl.pallas_call(
        kernel,
        out_shape=jax.ShapeDtypeStruct((1, n_pad), jnp.float32),
        grid_spec=pltpu.PrefetchScalarGridSpec(
            num_scalar_prefetch=0,
            grid=(n_pad // tile_n,),
            in_specs=[pl.BlockSpec((c, tile_n), lambda i: (0, i)),
                      pl.BlockSpec((1, tile_n), lambda i: (0, i))],
            out_specs=pl.BlockSpec((1, tile_n), lambda i: (0, i))),
        compiler_params=pltpu.CompilerParams(
            dimension_semantics=("parallel",),
            vmem_limit_bytes=vmem_limit),
    )(pred_t, label_row)

    loss = loss_row[0, :n]                   # (N,) per-example loss
    if weight is not None:
        loss = loss * weight.astype(jnp.float32)
    if reduction == 'mean':
        if avg_factor is None:
            loss = jnp.mean(loss)
        else:
            loss = jnp.sum(loss) / avg_factor
    elif reduction == 'sum':
        loss = jnp.sum(loss)
    # reduction == 'none' -> per-example vector
    return loss_weight * loss


# --------------------- pure-JAX reference (for validation) -------------------

def _reference_loss(pred, label, t1, t2, label_smooth_val, num_iters,
                    reduction, loss_weight):
    pred = pred.astype(jnp.float32)
    n, c = pred.shape
    avg = label_smooth_val / c
    on = 1.0 - label_smooth_val + avg
    one_hot = jnp.full((n, c), avg, jnp.float32)
    one_hot = one_hot.at[jnp.arange(n), label].set(on)

    def log_t(u, t):
        if t == 1.0:
            return jnp.log(u)
        return (jnp.power(u, 1.0 - t) - 1.0) / (1.0 - t)

    def exp_t(u, t):
        if t == 1.0:
            return jnp.exp(u)
        return jnp.power(jnp.maximum(1.0 + (1.0 - t) * u, 0.0), 1.0 / (1.0 - t))

    if t2 == 1.0:
        prob = jax.nn.softmax(pred, axis=-1)
    elif t2 > 1.0:
        mu = jnp.max(pred, -1, keepdims=True)
        init_norm = pred - mu
        norm_pred = init_norm
        for _ in range(num_iters):
            part = jnp.sum(exp_t(norm_pred, t2), -1, keepdims=True)
            norm_pred = init_norm * jnp.power(part, 1.0 - t2)
        part = jnp.sum(exp_t(norm_pred, t2), -1, keepdims=True)
        norm_const = -log_t(1.0 / part, t2) + mu
        prob = exp_t(pred - norm_const, t2)
    else:
        mu = jnp.max(pred, -1, keepdims=True)
        norm_pred = pred - mu
        eff = jnp.sum((norm_pred > -1.0 / (1.0 - t2)).astype(jnp.float32),
                      -1, keepdims=True)
        lower = jnp.zeros((n, 1), jnp.float32)
        upper = -log_t(1.0 / eff, t2) * jnp.ones_like(lower)
        for _ in range(num_iters):
            lp = (upper + lower) / 2.0
            sp = jnp.sum(exp_t(norm_pred - lp, t2), -1, keepdims=True)
            upd = (sp < 1.0).astype(jnp.float32)
            lower = lower * upd + (1.0 - upd) * lp
            upper = upper * (1.0 - upd) + upd * lp
        norm_const = (upper + lower) / 2.0 + mu
        prob = exp_t(pred - norm_const, t2)

    loss = (one_hot * log_t(one_hot + 1e-10, t1) - one_hot * log_t(prob, t1)
            - jnp.power(one_hot, 2.0 - t1) / (2.0 - t1)
            + jnp.power(prob, 2.0 - t1) / (2.0 - t1))
    loss = loss.sum(-1)
    if reduction == 'mean':
        loss = jnp.mean(loss)
    elif reduction == 'sum':
        loss = jnp.sum(loss)
    return loss_weight * loss


# ------------------------------- demo ----------------------------------------

if __name__ == "__main__":
    # BiTemperedLoss(t1, t2, num_classes=5, ...) on small leaf-disease shapes.
    N, C = 8, 5
    key = jax.random.PRNGKey(0)
    kx, kl = jax.random.split(key)
    pred = jax.random.normal(kx, (N, C), dtype=jnp.float32) * 3.0
    label = jax.random.randint(kl, (N,), 0, C, dtype=jnp.int32)

    # Exercise fixed-point (t2 > 1), binary-search (t2 < 1) and softmax (t2=1).
    for (t1, t2, sm) in [(0.8, 1.4, 0.1), (0.9, 0.7, 0.0), (0.85, 1.0, 0.05)]:
        got = bi_tempered_loss_pallas(
            pred, label, t1=t1, t2=t2, num_classes=C,
            label_smooth_val=sm, num_iters=5,
            reduction='mean', loss_weight=1.0)
        got = jax.block_until_ready(got)
        want = _reference_loss(pred, label, t1, t2, sm, 5, 'mean', 1.0)
        assert bool(jnp.isfinite(got))
        g, w = float(got), float(want)
        assert abs(g - w) <= 5e-3 * abs(w) + 5e-4, (t1, t2, sm, g, w)

    print("KERNEL_OK")
</pallas_src>

<mosaic_0001>
module attributes {stable_mosaic.version = 11 : i64} {
  func.func @_bi_tempered_kernel(%arg0: i32, %arg1: memref<5x128xf32, #tpu.memory_space<vmem>>, %arg2: memref<1x128xi32, #tpu.memory_space<vmem>>, %arg3: memref<1x128xf32, #tpu.memory_space<vmem>>) attributes {dimension_semantics = [#tpu.dimension_semantics<parallel>], iteration_bounds = array<i64: 1>, scalar_prefetch = 0 : i64, scratch_operands = 0 : i64, tpu.core_type = #tpu.core_type<tc>, window_params = [{transform_indices = @transform_0, window_bounds = array<i64: 5, 128>}, {transform_indices = @transform_1, window_bounds = array<i64: 1, 128>}, {transform_indices = @transform_2, window_bounds = array<i64: 1, 128>}]} {
    %c0 = arith.constant 0 : index
    %c0_0 = arith.constant 0 : index
    %0 = vector.load %arg1[%c0, %c0_0] : memref<5x128xf32, #tpu.memory_space<vmem>>, vector<5x128xf32>
    %c0_1 = arith.constant 0 : index
    %c0_2 = arith.constant 0 : index
    %1 = vector.load %arg2[%c0_1, %c0_2] : memref<1x128xi32, #tpu.memory_space<vmem>>, vector<1x128xi32>
    %2 = tpu.iota {dimensions = array<i32: 0>} : vector<5x128xi32>
    %3 = vector.broadcast %1 : vector<1x128xi32> to vector<5x128xi32>
    %4 = arith.cmpi eq, %2, %3 : vector<5x128xi32>
    %cst = arith.constant dense<0xFF800000> : vector<128xf32>
    %5 = vector.multi_reduction <maximumf>, %0, %cst [0] : vector<5x128xf32> to vector<128xf32>
    %6 = vector.shape_cast %5 : vector<128xf32> to vector<1x128xf32>
    %7 = vector.broadcast %6 : vector<1x128xf32> to vector<5x128xf32>
    %8 = arith.subf %0, %7 : vector<5x128xf32>
    %cst_3 = arith.constant -4.000000e-01 : f32
    %9 = vector.broadcast %cst_3 : f32 to vector<5x128xf32>
    %10 = arith.mulf %9, %8 : vector<5x128xf32>
    %cst_4 = arith.constant 1.000000e+00 : f32
    %11 = vector.broadcast %cst_4 : f32 to vector<5x128xf32>
    %12 = arith.addf %11, %10 : vector<5x128xf32>
    %cst_5 = arith.constant 0.000000e+00 : f32
    %13 = vector.broadcast %cst_5 : f32 to vector<5x128xf32>
    %14 = arith.maximumf %12, %13 : vector<5x128xf32>
    %15 = math.rsqrt %14 : vector<5x128xf32>
    %16 = arith.mulf %15, %15 : vector<5x128xf32>
    %17 = arith.mulf %16, %16 : vector<5x128xf32>
    %18 = arith.mulf %15, %17 : vector<5x128xf32>
    %cst_6 = arith.constant dense<0.000000e+00> : vector<128xf32>
    %19 = vector.multi_reduction <add>, %18, %cst_6 [0] : vector<5x128xf32> to vector<128xf32>
    %20 = vector.shape_cast %19 : vector<128xf32> to vector<1x128xf32>
    %21 = math.log %20 : vector<1x128xf32>
    %cst_7 = arith.constant -4.000000e-01 : f32
    %22 = vector.broadcast %cst_7 : f32 to vector<1x128xf32>
    %23 = arith.mulf %22, %21 : vector<1x128xf32>
    %24 = math.exp %23 : vector<1x128xf32>
    %25 = vector.broadcast %24 : vector<1x128xf32> to vector<5x128xf32>
    %26 = arith.mulf %8, %25 : vector<5x128xf32>
    %cst_8 = arith.constant -4.000000e-01 : f32
    %27 = vector.broadcast %cst_8 : f32 to vector<5x128xf32>
    %28 = arith.mulf %27, %26 : vector<5x128xf32>
    %cst_9 = arith.constant 1.000000e+00 : f32
    %29 = vector.broadcast %cst_9 : f32 to vector<5x128xf32>
    %30 = arith.addf %29, %28 : vector<5x128xf32>
    %cst_10 = arith.constant 0.000000e+00 : f32
    %31 = vector.broadcast %cst_10 : f32 to vector<5x128xf32>
    %32 = arith.maximumf %30, %31 : vector<5x128xf32>
    %33 = math.rsqrt %32 : vector<5x128xf32>
    %34 = arith.mulf %33, %33 : vector<5x128xf32>
    %35 = arith.mulf %34, %34 : vector<5x128xf32>
    %36 = arith.mulf %33, %35 : vector<5x128xf32>
    %cst_11 = arith.constant dense<0.000000e+00> : vector<128xf32>
    %37 = vector.multi_reduction <add>, %36, %cst_11 [0] : vector<5x128xf32> to vector<128xf32>
    %38 = vector.shape_cast %37 : vector<128xf32> to vector<1x128xf32>
    %39 = math.log %38 : vector<1x128xf32>
    %cst_12 = arith.constant -4.000000e-01 : f32
    %40 = vector.broadcast %cst_12 : f32 to vector<1x128xf32>
    %41 = arith.mulf %40, %39 : vector<1x128xf32>
    %42 = math.exp %41 : vector<1x128xf32>
    %43 = vector.broadcast %42 : vector<1x128xf32> to vector<5x128xf32>
    %44 = arith.mulf %8, %43 : vector<5x128xf32>
    %cst_13 = arith.constant -4.000000e-01 : f32
    %45 = vector.broadcast %cst_13 : f32 to vector<5x128xf32>
    %46 = arith.mulf %45, %44 : vector<5x128xf32>
    %cst_14 = arith.constant 1.000000e+00 : f32
    %47 = vector.broadcast %cst_14 : f32 to vector<5x128xf32>
    %48 = arith.addf %47, %46 : vector<5x128xf32>
    %cst_15 = arith.constant 0.000000e+00 : f32
    %49 = vector.broadcast %cst_15 : f32 to vector<5x128xf32>
    %50 = arith.maximumf %48, %49 : vector<5x128xf32>
    %51 = math.rsqrt %50 : vector<5x128xf32>
    %52 = arith.mulf %51, %51 : vector<5x128xf32>
    %53 = arith.mulf %52, %52 : vector<5x128xf32>
    %54 = arith.mulf %51, %53 : vector<5x128xf32>
    %cst_16 = arith.constant dense<0.000000e+00> : vector<128xf32>
    %55 = vector.multi_reduction <add>, %54, %cst_16 [0] : vector<5x128xf32> to vector<128xf32>
    %56 = vector.shape_cast %55 : vector<128xf32> to vector<1x128xf32>
    %57 = math.log %56 : vector<1x128xf32>
    %cst_17 = arith.constant -4.000000e-01 : f32
    %58 = vector.broadcast %cst_17 : f32 to vector<1x128xf32>
    %59 = arith.mulf %58, %57 : vector<1x128xf32>
    %60 = math.exp %59 : vector<1x128xf32>
    %61 = vector.broadcast %60 : vector<1x128xf32> to vector<5x128xf32>
    %62 = arith.mulf %8, %61 : vector<5x128xf32>
    %cst_18 = arith.constant -4.000000e-01 : f32
    %63 = vector.broadcast %cst_18 : f32 to vector<5x128xf32>
    %64 = arith.mulf %63, %62 : vector<5x128xf32>
    %cst_19 = arith.constant 1.000000e+00 : f32
    %65 = vector.broadcast %cst_19 : f32 to vector<5x128xf32>
    %66 = arith.addf %65, %64 : vector<5x128xf32>
    %cst_20 = arith.constant 0.000000e+00 : f32
    %67 = vector.broadcast %cst_20 : f32 to vector<5x128xf32>
    %68 = arith.maximumf %66, %67 : vector<5x128xf32>
    %69 = math.rsqrt %68 : vector<5x128xf32>
    %70 = arith.mulf %69, %69 : vector<5x128xf32>
    %71 = arith.mulf %70, %70 : vector<5x128xf32>
    %72 = arith.mulf %69, %71 : vector<5x128xf32>
    %cst_21 = arith.constant dense<0.000000e+00> : vector<128xf32>
    %73 = vector.multi_reduction <add>, %72, %cst_21 [0] : vector<5x128xf32> to vector<128xf32>
    %74 = vector.shape_cast %73 : vector<128xf32> to vector<1x128xf32>
    %75 = math.log %74 : vector<1x128xf32>
    %cst_22 = arith.constant -4.000000e-01 : f32
    %76 = vector.broadcast %cst_22 : f32 to vector<1x128xf32>
    %77 = arith.mulf %76, %75 : vector<1x128xf32>
    %78 = math.exp %77 : vector<1x128xf32>
    %79 = vector.broadcast %78 : vector<1x128xf32> to vector<5x128xf32>
    %80 = arith.mulf %8, %79 : vector<5x128xf32>
    %cst_23 = arith.constant -4.000000e-01 : f32
    %81 = vector.broadcast %cst_23 : f32 to vector<5x128xf32>
    %82 = arith.mulf %81, %80 : vector<5x128xf32>
    %cst_24 = arith.constant 1.000000e+00 : f32
    %83 = vector.broadcast %cst_24 : f32 to vector<5x128xf32>
    %84 = arith.addf %83, %82 : vector<5x128xf32>
    %cst_25 = arith.constant 0.000000e+00 : f32
    %85 = vector.broadcast %cst_25 : f32 to vector<5x128xf32>
    %86 = arith.maximumf %84, %85 : vector<5x128xf32>
    %87 = math.rsqrt %86 : vector<5x128xf32>
    %88 = arith.mulf %87, %87 : vector<5x128xf32>
    %89 = arith.mulf %88, %88 : vector<5x128xf32>
    %90 = arith.mulf %87, %89 : vector<5x128xf32>
    %cst_26 = arith.constant dense<0.000000e+00> : vector<128xf32>
    %91 = vector.multi_reduction <add>, %90, %cst_26 [0] : vector<5x128xf32> to vector<128xf32>
    %92 = vector.shape_cast %91 : vector<128xf32> to vector<1x128xf32>
    %93 = math.log %92 : vector<1x128xf32>
    %cst_27 = arith.constant -4.000000e-01 : f32
    %94 = vector.broadcast %cst_27 : f32 to vector<1x128xf32>
    %95 = arith.mulf %94, %93 : vector<1x128xf32>
    %96 = math.exp %95 : vector<1x128xf32>
    %97 = vector.broadcast %96 : vector<1x128xf32> to vector<5x128xf32>
    %98 = arith.mulf %8, %97 : vector<5x128xf32>
    %cst_28 = arith.constant -4.000000e-01 : f32
    %99 = vector.broadcast %cst_28 : f32 to vector<5x128xf32>
    %100 = arith.mulf %99, %98 : vector<5x128xf32>
    %cst_29 = arith.constant 1.000000e+00 : f32
    %101 = vector.broadcast %cst_29 : f32 to vector<5x128xf32>
    %102 = arith.addf %101, %100 : vector<5x128xf32>
    %cst_30 = arith.constant 0.000000e+00 : f32
    %103 = vector.broadcast %cst_30 : f32 to vector<5x128xf32>
    %104 = arith.maximumf %102, %103 : vector<5x128xf32>
    %105 = math.rsqrt %104 : vector<5x128xf32>
    %106 = arith.mulf %105, %105 : vector<5x128xf32>
    %107 = arith.mulf %106, %106 : vector<5x128xf32>
    %108 = arith.mulf %105, %107 : vector<5x128xf32>
    %cst_31 = arith.constant dense<0.000000e+00> : vector<128xf32>
    %109 = vector.multi_reduction <add>, %108, %cst_31 [0] : vector<5x128xf32> to vector<128xf32>
    %110 = vector.shape_cast %109 : vector<128xf32> to vector<1x128xf32>
    %111 = math.log %110 : vector<1x128xf32>
    %cst_32 = arith.constant 4.000000e-01 : f32
    %112 = vector.broadcast %cst_32 : f32 to vector<1x128xf32>
    %113 = arith.mulf %112, %111 : vector<1x128xf32>
    %114 = math.exp %113 : vector<1x128xf32>
    %cst_33 = arith.constant 1.000000e+00 : f32
    %115 = vector.broadcast %cst_33 : f32 to vector<1x128xf32>
    %116 = arith.subf %114, %115 : vector<1x128xf32>
    %cst_34 = arith.constant 0.000000e+00 : f32
    %117 = vector.broadcast %cst_34 : f32 to vector<1x128xf32>
    %118 = arith.subf %117, %116 : vector<1x128xf32>
    %cst_35 = arith.constant -4.000000e-01 : f32
    %119 = vector.broadcast %cst_35 : f32 to vector<1x128xf32>
    %120 = arith.divf %118, %119 : vector<1x128xf32>
    %121 = arith.addf %120, %6 : vector<1x128xf32>
    %122 = vector.broadcast %121 : vector<1x128xf32> to vector<5x128xf32>
    %123 = arith.subf %0, %122 : vector<5x128xf32>
    %cst_36 = arith.constant -4.000000e-01 : f32
    %124 = vector.broadcast %cst_36 : f32 to vector<5x128xf32>
    %125 = arith.mulf %124, %123 : vector<5x128xf32>
    %cst_37 = arith.constant 1.000000e+00 : f32
    %126 = vector.broadcast %cst_37 : f32 to vector<5x128xf32>
    %127 = arith.addf %126, %125 : vector<5x128xf32>
    %cst_38 = arith.constant 0.000000e+00 : f32
    %128 = vector.broadcast %cst_38 : f32 to vector<5x128xf32>
    %129 = arith.maximumf %127, %128 : vector<5x128xf32>
    %130 = math.rsqrt %129 : vector<5x128xf32>
    %131 = arith.mulf %130, %130 : vector<5x128xf32>
    %132 = arith.mulf %131, %131 : vector<5x128xf32>
    %133 = arith.mulf %130, %132 : vector<5x128xf32>
    %cst_39 = arith.constant 0.000000e+00 : f32
    %134 = vector.broadcast %cst_39 : f32 to vector<5x128xf32>
    %135 = arith.select %4, %130, %134 : vector<5x128xi1>, vector<5x128xf32>
    %cst_40 = arith.constant dense<0.000000e+00> : vector<128xf32>
    %136 = vector.multi_reduction <add>, %135, %cst_40 [0] : vector<5x128xf32> to vector<128xf32>
    %137 = vector.shape_cast %136 : vector<128xf32> to vector<1x128xf32>
    %cst_41 = arith.constant 1.000000e+00 : f32
    %138 = vector.broadcast %cst_41 : f32 to vector<1x128xf32>
    %139 = arith.subf %137, %138 : vector<1x128xf32>
    %cst_42 = arith.constant 5.000000e+00 : f32
    %140 = vector.broadcast %cst_42 : f32 to vector<1x128xf32>
    %141 = arith.mulf %139, %140 : vector<1x128xf32>
    %cst_43 = arith.constant dense<0.000000e+00> : vector<128xf32>
    %142 = vector.multi_reduction <add>, %130, %cst_43 [0] : vector<5x128xf32> to vector<128xf32>
    %143 = vector.shape_cast %142 : vector<128xf32> to vector<1x128xf32>
    %cst_44 = arith.constant 5.000000e+00 : f32
    %144 = vector.broadcast %cst_44 : f32 to vector<1x128xf32>
    %145 = arith.subf %143, %144 : vector<1x128xf32>
    %cst_45 = arith.constant 5.000000e+00 : f32
    %146 = vector.broadcast %cst_45 : f32 to vector<1x128xf32>
    %147 = arith.mulf %145, %146 : vector<1x128xf32>
    %148 = arith.mulf %130, %133 : vector<5x128xf32>
    %cst_46 = arith.constant dense<0.000000e+00> : vector<128xf32>
    %149 = vector.multi_reduction <add>, %148, %cst_46 [0] : vector<5x128xf32> to vector<128xf32>
    %150 = vector.shape_cast %149 : vector<128xf32> to vector<1x128xf32>
    %cst_47 = arith.constant 0.833333313 : f32
    %151 = vector.broadcast %cst_47 : f32 to vector<1x128xf32>
    %152 = arith.mulf %150, %151 : vector<1x128xf32>
    %cst_48 = arith.constant 0.899999976 : f32
    %153 = vector.broadcast %cst_48 : f32 to vector<1x128xf32>
    %154 = arith.mulf %153, %141 : vector<1x128xf32>
    %cst_49 = arith.constant 2.000000e-02 : f32
    %155 = vector.broadcast %cst_49 : f32 to vector<1x128xf32>
    %156 = arith.mulf %155, %147 : vector<1x128xf32>
    %157 = arith.addf %154, %156 : vector<1x128xf32>
    %cst_50 = arith.constant -1.07762742 : f32
    %158 = vector.broadcast %cst_50 : f32 to vector<1x128xf32>
    %159 = arith.subf %158, %157 : vector<1x128xf32>
    %160 = arith.addf %159, %152 : vector<1x128xf32>
    %c0_51 = arith.constant 0 : index
    %c0_52 = arith.constant 0 : index
    %161 = vector.load %arg3[%c0_51, %c0_52] : memref<1x128xf32, #tpu.memory_space<vmem>>, vector<1x128xf32>
    tpu.vector_store %arg3[%c0_51, %c0_52], %160 {strides = array<i32>} : memref<1x128xf32, #tpu.memory_space<vmem>>, vector<1x128xf32>,
    return
  }
  func.func @transform_0(%arg0: i32) -> (i32, i32) {
    %c0_i32 = arith.constant 0 : i32
    %c0_i32_0 = arith.constant 0 : i32
    return %c0_i32, %arg0 : i32, i32
  }
  func.func @transform_1(%arg0: i32) -> (i32, i32) {
    %c0_i32 = arith.constant 0 : i32
    %c0_i32_0 = arith.constant 0 : i32
    return %c0_i32, %arg0 : i32, i32
  }
  func.func @transform_2(%arg0: i32) -> (i32, i32) {
    %c0_i32 = arith.constant 0 : i32
    %c0_i32_0 = arith.constant 0 : i32
    return %c0_i32, %arg0 : i32, i32
  }
}

</mosaic_0001>

<llo_original>
// kernel: tpu_custom_call.1
$region0: #{tpu_custom_call.1}
  #allocation0 [shape = 'u32[]', space=smem, size = 0x4, offset = 0x4, fixed_abs, tag = 'smem constant byte address 0x4 - core index']
  #allocation1 [shape = 'u32[144,128]{1,0:T(1,128)}', space=vmem, size = 0x12000, scoped, tag = 'internal scratch']
  %s0 = inlined_call_operand.hbm [shape: f32[5,128], index: 0, kind: input, shape index: {}]
  %s1 = inlined_call_operand.vmem [shape: s32[1,128], index: 1, kind: input, shape index: {}]
  %s2 = inlined_call_operand.hbm [shape: f32[1,128], index: 2, kind: output, shape index: {}]
  %s3 = sld [smem:[#allocation0]]
  $region22: #{tpu_custom_call.1} parent=0
    _
  %s5 = ssub.s32 1, %s3
  %s6 = scalar_select 0, %s5, %s3
  $region1: #{tpu_custom_call.1} parent=0
    #allocation2 [shape = 'u8[4096]{0}', space=vmem, size = 0x1000, scoped, tag = 'input window, operand 0, single buffered']
    #allocation3 [shape = 's32[1]{0}', space=sflag, size = 0x4, scoped, tag = 'scoped memory for tpu_custom_call.1']
    #allocation4 [shape = 's32[1]{0}', space=sflag, size = 0x4, scoped, tag = 'scoped memory for tpu_custom_call.1']
    #allocation5 [shape = 'u8[512]{0}', space=vmem, size = 0x400, scoped, tag = 'output window, operand 0, single buffered']
    %7 = vsyncpa [#allocation3], 0
    %8 = vsyncpa [#allocation4], 0
    // Predicated region
    $region2: #{tpu_custom_call.1} parent=1 // pred_check
      _
    $region3: #{tpu_custom_call.1} parent=1 // pred_check_branch
      %10 = sbr.rel (0) target = $region5
    $region4: #{tpu_custom_call.1} parent=1 // pred_region
      %s12 = ssub.s32 128, 128
      %13 = vsyncadd [#allocation3], %s12
      %s15 = sshll.u32 [#allocation2], 4
      %s16 = int_to_ptr.vmem [resolvable:$true] %s15
      %18 = dma.hbm_to_vmem [thread:$0]  %s0, 128, %s16, [#allocation3]
    $region5: #{tpu_custom_call.1} parent=1 // pred_fallthru
      _
    // Predicated region
    $region6: #{tpu_custom_call.1} parent=1 // pred_check
      _
    $region7: #{tpu_custom_call.1} parent=1 // pred_check_branch
      %20 = sbr.rel (0) target = $region9
    $region8: #{tpu_custom_call.1} parent=1 // pred_region
      _
    $region9: #{tpu_custom_call.1} parent=1 // pred_fallthru
      _
    // Predicated region
    $region10: #{tpu_custom_call.1} parent=1 // pred_check
      _
    $region11: #{tpu_custom_call.1} parent=1 // pred_check_branch
      %22 = sbr.rel (0) target = $region13
    $region12: #{tpu_custom_call.1} parent=1 // pred_region
      %23 = dma.done [#allocation3], 128
    $region13: #{tpu_custom_call.1} parent=1 // pred_fallthru
      _
    %v24 = vld [vmem:[#allocation2] sm:$0x1f]
    %v25 = vld [vmem:[%s1] sm:$0x1]
    %v26 = vlaneseq
    %v27 = vshrl.u32 %v26, 7
    %v28 = vlaneseq
    %v29 = vshrl.u32 %v28, 7
    %v30 = vsub.s32 0, %v29
    %v31 = vrot.slane %v25, %v30
    %vm32 = vcmp.eq.s32.totalorder %v27, %v31
    %vm33 = vcmask 1044480
    %v34 = vsel %vm33, %v24, -inf
    %v35 = vrot.slane %v34, 4
    %v36 = vmax.f32 %v34, %v35
    %v37 = vrot.slane %v36, 2
    %v38 = vmax.f32 %v36, %v37
    %v39 = vrot.slane %v38, 1
    %v40 = vmax.f32 %v38, %v39
    %v41 = vsub.f32 %v24, %v40
    %v42 = vmul.f32 %v41, -0.4
    %v43 = vadd.f32 %v42, 1.0
    %v44 = vmax.f32 %v43, 0.0
    %v45 = vrsqrt.pop %v44
    %v46 = vmul.f32 %v45, %v45
    %v47 = vmul.f32 %v46, %v46
    %v48 = vmul.f32 %v45, %v47
    %v49 = vsel %vm33, %v48, 0.0
    %v50 = vrot.slane %v49, 4
    %v51 = vadd.f32 %v49, %v50
    %v52 = vrot.slane %v51, 2
    %v53 = vadd.f32 %v51, %v52
    %v54 = vrot.slane %v53, 1
    %v55 = vadd.f32 %v53, %v54
    %v56 = vlog2.pop %v55
    %v57 = vmul.f32 %v56, 0.6931472
    %v58 = vmul.f32 %v57, -0.4
    %v59 = vmul.f32 %v58, 1.442695
    %v60 = vpow.pop %v59
    %v61 = vmul.f32 %v41, %v60
    %v62 = vmul.f32 %v61, -0.4
    %v63 = vadd.f32 %v62, 1.0
    %v64 = vmax.f32 %v63, 0.0
    %v65 = vrsqrt.pop %v64
    %v66 = vmul.f32 %v65, %v65
    %v67 = vmul.f32 %v66, %v66
    %v68 = vmul.f32 %v65, %v67
    %v69 = vsel %vm33, %v68, 0.0
    %v70 = vrot.slane %v69, 4
    %v71 = vadd.f32 %v69, %v70
    %v72 = vrot.slane %v71, 2
    %v73 = vadd.f32 %v71, %v72
    %v74 = vrot.slane %v73, 1
    %v75 = vadd.f32 %v73, %v74
    %v76 = vlog2.pop %v75
    %v77 = vmul.f32 %v76, 0.6931472
    %v78 = vmul.f32 %v77, -0.4
    %v79 = vmul.f32 %v78, 1.442695
    %v80 = vpow.pop %v79
    %v81 = vmul.f32 %v41, %v80
    %v82 = vmul.f32 %v81, -0.4
    %v83 = vadd.f32 %v82, 1.0
    %v84 = vmax.f32 %v83, 0.0
    %v85 = vrsqrt.pop %v84
    %v86 = vmul.f32 %v85, %v85
    %v87 = vmul.f32 %v86, %v86
    %v88 = vmul.f32 %v85, %v87
    %v89 = vsel %vm33, %v88, 0.0
    %v90 = vrot.slane %v89, 4
    %v91 = vadd.f32 %v89, %v90
    %v92 = vrot.slane %v91, 2
    %v93 = vadd.f32 %v91, %v92
    %v94 = vrot.slane %v93, 1
    %v95 = vadd.f32 %v93, %v94
    %v96 = vlog2.pop %v95
    %v97 = vmul.f32 %v96, 0.6931472
    %v98 = vmul.f32 %v97, -0.4
    %v99 = vmul.f32 %v98, 1.442695
    %v100 = vpow.pop %v99
    %v101 = vmul.f32 %v41, %v100
    %v102 = vmul.f32 %v101, -0.4
    %v103 = vadd.f32 %v102, 1.0
    %v104 = vmax.f32 %v103, 0.0
    %v105 = vrsqrt.pop %v104
    %v106 = vmul.f32 %v105, %v105
    %v107 = vmul.f32 %v106, %v106
    %v108 = vmul.f32 %v105, %v107
    %v109 = vsel %vm33, %v108, 0.0
    %v110 = vrot.slane %v109, 4
    %v111 = vadd.f32 %v109, %v110
    %v112 = vrot.slane %v111, 2
    %v113 = vadd.f32 %v111, %v112
    %v114 = vrot.slane %v113, 1
    %v115 = vadd.f32 %v113, %v114
    %v116 = vlog2.pop %v115
    %v117 = vmul.f32 %v116, 0.6931472
    %v118 = vmul.f32 %v117, -0.4
    %v119 = vmul.f32 %v118, 1.442695
    %v120 = vpow.pop %v119
    %v121 = vmul.f32 %v41, %v120
    %v122 = vmul.f32 %v121, -0.4
    %v123 = vadd.f32 %v122, 1.0
    %v124 = vmax.f32 %v123, 0.0
    %v125 = vrsqrt.pop %v124
    %v126 = vmul.f32 %v125, %v125
    %v127 = vmul.f32 %v126, %v126
    %v128 = vmul.f32 %v125, %v127
    %v129 = vsel %vm33, %v128, 0.0
    %v130 = vrot.slane %v129, 4
    %v131 = vadd.f32 %v129, %v130
    %v132 = vrot.slane %v131, 2
    %v133 = vadd.f32 %v131, %v132
    %v134 = vrot.slane %v133, 1
    %v135 = vadd.f32 %v133, %v134
    %v136 = vlog2.pop %v135
    %v137 = vmul.f32 %v136, 0.6931472
    %v138 = vmul.f32 %v137, -0.4
    %v139 = vmul.f32 %v138, 1.442695
    %v140 = vpow.pop %v139
    %v141 = vmul.f32 %v41, %v140
    %v142 = vmul.f32 %v141, -0.4
    %v143 = vadd.f32 %v142, 1.0
    %v144 = vmax.f32 %v143, 0.0
    %v145 = vrsqrt.pop %v144
    %v146 = vmul.f32 %v145, %v145
    %v147 = vmul.f32 %v146, %v146
    %v148 = vmul.f32 %v145, %v147
    %v149 = vsel %vm33, %v148, 0.0
    %v150 = vrot.slane %v149, 4
    %v151 = vadd.f32 %v149, %v150
    %v152 = vrot.slane %v151, 2
    %v153 = vadd.f32 %v151, %v152
    %v154 = vrot.slane %v153, 1
    %v155 = vadd.f32 %v153, %v154
    %v156 = vlog2.pop %v155
    %v157 = vmul.f32 %v156, 0.6931472
    %v158 = vmul.f32 %v157, 0.4
    %v159 = vmul.f32 %v158, 1.442695
    %v160 = vpow.pop %v159
    %v161 = vsub.f32 %v160, 1.0
    %v162 = vsub.f32 0.0, %v161
    %v163 = vrcp.pop -0.4
    %v164 = vmul.f32 %v162, %v163
    %v165 = vadd.f32 %v164, %v40
    %v166 = vsub.f32 %v24, %v165
    %v167 = vmul.f32 %v166, -0.4
    %v168 = vadd.f32 %v167, 1.0
    %v169 = vmax.f32 %v168, 0.0
    %v170 = vrsqrt.pop %v169
    %v171 = vmul.f32 %v170, %v170
    %v172 = vmul.f32 %v171, %v171
    %v173 = vmul.f32 %v170, %v172
    %v174 = vsel %vm32, %v170, 0.0
    %v175 = vsel %vm33, %v174, 0.0
    %v176 = vrot.slane %v175, 4
    %v177 = vadd.f32 %v175, %v176
    %v178 = vrot.slane %v177, 2
    %v179 = vadd.f32 %v177, %v178
    %v180 = vrot.slane %v179, 1
    %v181 = vadd.f32 %v179, %v180
    %v182 = vsub.f32 %v181, 1.0
    %v183 = vmul.f32 %v182, 5.0
    %v184 = vsel %vm33, %v170, 0.0
    %v185 = vrot.slane %v184, 4
    %v186 = vadd.f32 %v184, %v185
    %v187 = vrot.slane %v186, 2
    %v188 = vadd.f32 %v186, %v187
    %v189 = vrot.slane %v188, 1
    %v190 = vadd.f32 %v188, %v189
    %v191 = vsub.f32 %v190, 5.0
    %v192 = vmul.f32 %v191, 5.0
    %v193 = vmul.f32 %v170, %v173
    %v194 = vsel %vm33, %v193, 0.0
    %v195 = vrot.slane %v194, 4
    %v196 = vadd.f32 %v194, %v195
    %v197 = vrot.slane %v196, 2
    %v198 = vadd.f32 %v196, %v197
    %v199 = vrot.slane %v198, 1
    %v200 = vadd.f32 %v198, %v199
    %v201 = vmul.f32 %v200, 0.8333333
    %v202 = vmul.f32 %v183, 0.9
    %v203 = vmul.f32 %v192, 0.02
    %v204 = vadd.f32 %v202, %v203
    %v205 = vsub.f32 -1.0776274, %v204
    %v206 = vadd.f32 %v205, %v201
    %207 = vst [vmem:[#allocation5] sm:$0x1] %v206
    // Predicated region
    $region14: #{tpu_custom_call.1} parent=1 // pred_check
      _
    $region15: #{tpu_custom_call.1} parent=1 // pred_check_branch
      %209 = sbr.rel (0) target = $region17
    $region16: #{tpu_custom_call.1} parent=1 // pred_region
      %s211 = ssub.s32 16, 16
      %212 = vsyncadd [#allocation4], %s211
      %s214 = sshll.u32 [#allocation5], 4
      %s215 = int_to_ptr.vmem [resolvable:$true] %s214
      %217 = dma.vmem_to_hbm [thread:$0]  %s215, 16, %s2, [#allocation4]
    $region17: #{tpu_custom_call.1} parent=1 // pred_fallthru
      _
    // Predicated region
    $region18: #{tpu_custom_call.1} parent=1 // pred_check
      _
    $region19: #{tpu_custom_call.1} parent=1 // pred_check_branch
      %219 = sbr.rel (0) target = $region21
    $region20: #{tpu_custom_call.1} parent=1 // pred_region
      %220 = dma.done [#allocation4], 16
    $region21: #{tpu_custom_call.1} parent=1 // pred_fallthru
      _
    %221 = vsyncpa [#allocation3], 1
    %222 = vsyncpa [#allocation4], 1

</llo_original>
